<compile_context>
chip_gen: v7x
topology: tpu7x:2x2x1
jax: 0.10.0
libtpu: 0.0.40
codegen_flags: <defaults>
</compile_context>

<pallas_src>
import functools

import jax
import jax.numpy as jnp
from jax import lax
from jax.experimental import pallas as pl
from jax.experimental.pallas import tpu as pltpu


def _attn_kernel(q_ref, k_ref, v_ref, o_ref, w_ref):
    """One (batch, q-tile) grid step.

    q_ref: (1, TQ, D) in MXU dtype, 1/sqrt(d_k) already folded in.
    k_ref / v_ref: (1, S, D) in MXU dtype -- resident across the q-tile axis.
    o_ref: (1, TQ, D); w_ref: (1, TQ, S), both in the module's output dtype.
    """
    q = q_ref[0]
    k = k_ref[0]
    v = v_ref[0]

    # scores = (q * scale) @ k^T without materializing k.T: contract the last
    # dim of both operands so the MXU is fed directly (no XLU relayout of K).
    scores = lax.dot_general(
        q, k,
        dimension_numbers=(((1,), (1,)), ((), ())),
        preferred_element_type=jnp.float32,
    )  # (TQ, S) f32

    # Numerically-stable softmax over keys (f32 elementwise path; v5e-safe).
    m = jnp.max(scores, axis=-1, keepdims=True)
    e = jnp.exp(scores - m)
    denom = jnp.sum(e, axis=-1, keepdims=True)
    weights = e * pl.reciprocal(denom, approx=True)  # EUP vrcp: free bundle slot

    # output = weights @ v, f32 accumulation on the MXU.
    out = jnp.dot(weights.astype(v.dtype), v, preferred_element_type=jnp.float32)

    o_ref[0] = out.astype(o_ref.dtype)
    w_ref[0] = weights.astype(w_ref.dtype)


def _pick_q_tile(s):
    """Query-tile size: lane/VMEM friendly when aligned, full-dim otherwise."""
    if s % 128 == 0:
        return 128  # lane-dense weights stores; fits v7x's 64 MiB comfortably
    for cand in (64, 32, 16, 8):  # sublane-aligned divisors for mid-size S
        if s % cand == 0:
            return cand
    return s  # small / ragged sequence: one block covers the whole q axis


@functools.partial(jax.jit, static_argnames=("mxu_dtype",))
def scaled_dot_product_attention(query, key, value, *, mxu_dtype=None):
    """query/key/value: (B, S, D). Returns (output (B, S, D), weights (B, S, S))."""
    B, S, D = query.shape
    out_dtype = query.dtype
    scale = 1.0 / (D ** 0.5)
    if mxu_dtype is None:
        # bf16 MXU operands (with f32 accumulate) are ~3-6x faster than f32 on
        # v5e/v6e/v7x. Pass mxu_dtype=jnp.float32 for strict f32 parity.
        mxu_dtype = jnp.bfloat16 if query.dtype == jnp.float32 else query.dtype

    # Fold the softmax scale into q in f32, then cast Q/K/V ONCE in the wrapper
    # (fused by XLA). This removes the per-q-tile VPU cast of the resident K/V
    # inside the kernel and halves Q/K/V DMA bytes when going f32 -> bf16.
    qs = (query.astype(jnp.float32) * jnp.float32(scale)).astype(mxu_dtype)
    kc = key.astype(mxu_dtype)
    vc = value.astype(mxu_dtype)

    TQ = _pick_q_tile(S)
    n_q = S // TQ

    # No HBM-side padding: block last dims equal the full array dims, which the
    # (8,128) rule permits, so there is no pad round-trip and no (B, S, S)
    # weights slice on the way out.
    q_spec = pl.BlockSpec((1, TQ, D), lambda b, qi: (b, qi, 0))
    kv_spec = pl.BlockSpec((1, S, D), lambda b, qi: (b, 0, 0))  # resident over q-tiles
    o_spec = pl.BlockSpec((1, TQ, D), lambda b, qi: (b, qi, 0))
    w_spec = pl.BlockSpec((1, TQ, S), lambda b, qi: (b, qi, 0))

    out_shapes = (
        jax.ShapeDtypeStruct((B, S, D), out_dtype),
        jax.ShapeDtypeStruct((B, S, S), out_dtype),
    )

    # Generation-aware VMEM budget: derive from the device's capacity with
    # headroom (v6e/v5e: 128 MiB, v7x: 64 MiB) instead of a blanket 64 MiB cap.
    try:
        vmem_cap = pltpu.get_tpu_info().vmem_capacity_bytes
    except Exception:
        vmem_cap = 64 * 1024 * 1024  # conservative fallback (fits every gen)
    in_b = jnp.dtype(mxu_dtype).itemsize
    out_b = jnp.dtype(out_dtype).itemsize
    need = (
        2 * TQ * D * in_b          # q block, double-buffered
        + 2 * 2 * S * D * in_b     # resident k, v, double-buffered across batch
        + 2 * TQ * D * out_b       # output block, double-buffered
        + 2 * TQ * S * out_b       # weights block, double-buffered
        + 4 * TQ * S * 4           # f32 scores / exp / weights intermediates
    )
    vmem_limit = int(min(0.85 * vmem_cap, max(1.5 * need, 16 * 1024 * 1024)))

    out, weights = pl.pallas_call(
        _attn_kernel,
        out_shape=out_shapes,
        grid_spec=pltpu.PrefetchScalarGridSpec(
            num_scalar_prefetch=0,
            grid=(B, n_q),
            in_specs=[q_spec, kv_spec, kv_spec],
            out_specs=[o_spec, w_spec],
        ),
        compiler_params=pltpu.CompilerParams(
            dimension_semantics=("parallel", "parallel"),
            vmem_limit_bytes=vmem_limit,
        ),
    )(qs, kc, vc)
    return out, weights


def _reference(query, key, value):
    scale = 1.0 / (query.shape[-1] ** 0.5)
    scores = jnp.einsum("bqd,bkd->bqk", query, key) * scale
    weights = jax.nn.softmax(scores, axis=-1)
    output = jnp.einsum("bqk,bkd->bqd", weights, value)
    return output, weights


if __name__ == "__main__":
    d_k = 8
    batch_size = 2
    seq_len = 5

    root = jax.random.PRNGKey(0)
    kq, kk, kv = jax.random.split(root, 3)
    query = jax.random.normal(kq, (batch_size, seq_len, d_k), dtype=jnp.float32)
    key = jax.random.normal(kk, (batch_size, seq_len, d_k), dtype=jnp.float32)
    value = jax.random.normal(kv, (batch_size, seq_len, d_k), dtype=jnp.float32)

    ref_out, ref_w = _reference(query, key, value)

    # Default path: bf16 MXU operands, f32 accumulate -> loose tolerance.
    out, weights = scaled_dot_product_attention(query, key, value)
    out = jax.block_until_ready(out)
    weights = jax.block_until_ready(weights)
    assert jnp.allclose(out, ref_out, atol=5e-2, rtol=5e-2)
    assert jnp.allclose(weights, ref_w, atol=5e-2, rtol=5e-2)

    # Strict f32 MXU path: tight parity with the PyTorch reference
    # (approx-reciprocal softmax denominator slightly loosens exactness).
    out32, w32 = scaled_dot_product_attention(query, key, value, mxu_dtype=jnp.float32)
    out32 = jax.block_until_ready(out32)
    w32 = jax.block_until_ready(w32)
    assert jnp.allclose(out32, ref_out, atol=2e-3, rtol=2e-3)
    assert jnp.allclose(w32, ref_w, atol=2e-3, rtol=2e-3)

    print("KERNEL_OK")
</pallas_src>

<mosaic_0001>
module attributes {stable_mosaic.version = 11 : i64} {
  func.func @_attn_kernel(%arg0: i32, %arg1: i32, %arg2: memref<1x5x8xbf16, #tpu.memory_space<vmem>>, %arg3: memref<1x5x8xbf16, #tpu.memory_space<vmem>>, %arg4: memref<1x5x8xbf16, #tpu.memory_space<vmem>>, %arg5: memref<1x5x8xf32, #tpu.memory_space<vmem>>, %arg6: memref<1x5x5xf32, #tpu.memory_space<vmem>>) attributes {dimension_semantics = [#tpu.dimension_semantics<parallel>, #tpu.dimension_semantics<parallel>], iteration_bounds = array<i64: 2, 1>, scalar_prefetch = 0 : i64, scratch_operands = 0 : i64, tpu.core_type = #tpu.core_type<tc>, window_params = [{transform_indices = @transform_0, window_bounds = array<i64: 1, 5, 8>}, {transform_indices = @transform_1, window_bounds = array<i64: 1, 5, 8>}, {transform_indices = @transform_2, window_bounds = array<i64: 1, 5, 8>}, {transform_indices = @transform_3, window_bounds = array<i64: 1, 5, 8>}, {transform_indices = @transform_4, window_bounds = array<i64: 1, 5, 5>}]} {
    %c0 = arith.constant 0 : index
    %c0_0 = arith.constant 0 : index
    %c0_1 = arith.constant 0 : index
    %0 = vector.load %arg2[%c0, %c0_0, %c0_1] : memref<1x5x8xbf16, #tpu.memory_space<vmem>>, vector<1x5x8xbf16>
    %1 = vector.shape_cast %0 : vector<1x5x8xbf16> to vector<5x8xbf16>
    %c0_2 = arith.constant 0 : index
    %c0_3 = arith.constant 0 : index
    %c0_4 = arith.constant 0 : index
    %2 = vector.load %arg3[%c0_2, %c0_3, %c0_4] : memref<1x5x8xbf16, #tpu.memory_space<vmem>>, vector<1x5x8xbf16>
    %3 = vector.shape_cast %2 : vector<1x5x8xbf16> to vector<5x8xbf16>
    %c0_5 = arith.constant 0 : index
    %c0_6 = arith.constant 0 : index
    %c0_7 = arith.constant 0 : index
    %4 = vector.load %arg4[%c0_5, %c0_6, %c0_7] : memref<1x5x8xbf16, #tpu.memory_space<vmem>>, vector<1x5x8xbf16>
    %5 = vector.shape_cast %4 : vector<1x5x8xbf16> to vector<5x8xbf16>
    %cst = arith.constant dense<0.000000e+00> : vector<5x5xf32>
    %6 = tpu.matmul %1, %3, %cst {dimension_numbers = #tpu.dot_dimension_numbers<[1], [1], [0], [0], [0, 0, 1, 0], [], []>} : vector<5x8xbf16>, vector<5x8xbf16>, vector<5x5xf32> -> vector<5x5xf32>
    %cst_8 = arith.constant dense<0xFF800000> : vector<5xf32>
    %7 = vector.multi_reduction <maximumf>, %6, %cst_8 [1] : vector<5x5xf32> to vector<5xf32>
    %8 = vector.shape_cast %7 : vector<5xf32> to vector<5x1xf32>
    %9 = vector.broadcast %8 : vector<5x1xf32> to vector<5x5xf32>
    %10 = arith.subf %6, %9 : vector<5x5xf32>
    %11 = math.exp %10 : vector<5x5xf32>
    %cst_9 = arith.constant dense<0.000000e+00> : vector<5xf32>
    %12 = vector.multi_reduction <add>, %11, %cst_9 [1] : vector<5x5xf32> to vector<5xf32>
    %13 = vector.shape_cast %12 : vector<5xf32> to vector<5x1xf32>
    %14 = tpu.reciprocal %13 {approx = true} : vector<5x1xf32> -> vector<5x1xf32>
    %15 = vector.broadcast %14 : vector<5x1xf32> to vector<5x5xf32>
    %16 = arith.mulf %11, %15 : vector<5x5xf32>
    %17 = arith.truncf %16 : vector<5x5xf32> to vector<5x5xbf16>
    %cst_10 = arith.constant dense<0.000000e+00> : vector<5x8xf32>
    %18 = tpu.matmul %17, %5, %cst_10 {dimension_numbers = #tpu.dot_dimension_numbers<[1], [0], [0], [1], [0, 0, 1, 1], [], []>} : vector<5x5xbf16>, vector<5x8xbf16>, vector<5x8xf32> -> vector<5x8xf32>
    %c0_11 = arith.constant 0 : index
    %c0_12 = arith.constant 0 : index
    %c0_13 = arith.constant 0 : index
    %19 = vector.load %arg5[%c0_11, %c0_12, %c0_13] : memref<1x5x8xf32, #tpu.memory_space<vmem>>, vector<1x5x8xf32>
    %20 = vector.shape_cast %19 : vector<1x5x8xf32> to vector<5x8xf32>
    %21 = vector.shape_cast %18 : vector<5x8xf32> to vector<1x5x8xf32>
    tpu.vector_store %arg5[%c0_11, %c0_12, %c0_13], %21 {strides = array<i32>} : memref<1x5x8xf32, #tpu.memory_space<vmem>>, vector<1x5x8xf32>,
    %c0_14 = arith.constant 0 : index
    %c0_15 = arith.constant 0 : index
    %c0_16 = arith.constant 0 : index
    %22 = vector.load %arg6[%c0_14, %c0_15, %c0_16] : memref<1x5x5xf32, #tpu.memory_space<vmem>>, vector<1x5x5xf32>
    %23 = vector.shape_cast %22 : vector<1x5x5xf32> to vector<5x5xf32>
    %24 = vector.shape_cast %16 : vector<5x5xf32> to vector<1x5x5xf32>
    tpu.vector_store %arg6[%c0_14, %c0_15, %c0_16], %24 {strides = array<i32>} : memref<1x5x5xf32, #tpu.memory_space<vmem>>, vector<1x5x5xf32>,
    return
  }
  func.func @transform_0(%arg0: i32, %arg1: i32) -> (i32, i32, i32) {
    %c0_i32 = arith.constant 0 : i32
    %c0_i32_0 = arith.constant 0 : i32
    return %arg0, %arg1, %c0_i32 : i32, i32, i32
  }
  func.func @transform_1(%arg0: i32, %arg1: i32) -> (i32, i32, i32) {
    %c0_i32 = arith.constant 0 : i32
    %c0_i32_0 = arith.constant 0 : i32
    %c0_i32_1 = arith.constant 0 : i32
    return %arg0, %c0_i32, %c0_i32_0 : i32, i32, i32
  }
  func.func @transform_2(%arg0: i32, %arg1: i32) -> (i32, i32, i32) {
    %c0_i32 = arith.constant 0 : i32
    %c0_i32_0 = arith.constant 0 : i32
    %c0_i32_1 = arith.constant 0 : i32
    return %arg0, %c0_i32, %c0_i32_0 : i32, i32, i32
  }
  func.func @transform_3(%arg0: i32, %arg1: i32) -> (i32, i32, i32) {
    %c0_i32 = arith.constant 0 : i32
    %c0_i32_0 = arith.constant 0 : i32
    return %arg0, %arg1, %c0_i32 : i32, i32, i32
  }
  func.func @transform_4(%arg0: i32, %arg1: i32) -> (i32, i32, i32) {
    %c0_i32 = arith.constant 0 : i32
    %c0_i32_0 = arith.constant 0 : i32
    return %arg0, %arg1, %c0_i32 : i32, i32, i32
  }
}

</mosaic_0001>

<llo_original>
// kernel: scaled_dot_product_attention.1
$region0: #{scaled_dot_product_attention.1}
  #allocation0 [shape = 'u32[]', space=smem, size = 0x4, offset = 0x4, fixed_abs, tag = 'smem constant byte address 0x4 - core index']
  #allocation1 [shape = 'u32[144,128]{1,0:T(1,128)}', space=vmem, size = 0x12000, scoped, tag = 'internal scratch']
  %s0 = inlined_call_operand.vmem [shape: bf16[2,5,8], index: 0, kind: input, shape index: {}]
  %s1 = inlined_call_operand.vmem [shape: bf16[2,5,8], index: 1, kind: input, shape index: {}]
  %s2 = inlined_call_operand.vmem [shape: bf16[2,5,8], index: 2, kind: input, shape index: {}]
  %s3 = inlined_call_operand.vmem [shape: f32[2,5,8], index: 3, kind: output, shape index: {0}]
  %s4 = inlined_call_operand.vmem [shape: f32[2,5,5], index: 4, kind: output, shape index: {1}]
  %5 = xla_tuple %s3, %s4
  %s6 = sld [smem:[#allocation0]]
  $region53: #{scaled_dot_product_attention.1} parent=0
    _
  %s8 = ssub.s32 1, %s6
  %s9 = scalar_select 0, %s8, %s6
  loop: start=0, step=1, limit=4
  $region2: #{scaled_dot_product_attention.1} parent=0 // loop_pre_header
    _
  $region3: #{scaled_dot_product_attention.1} parent=0 // loop_header
    %s11 = sphi 0, %s15
    %p12 = scmp.ge.s32.totalorder %s11, 4
    %s18 = sphi 0, %s30
    %s19 = sphi 0, %s26
    %s20 = sphi 0, %s18
    %s21 = sphi 0, %s19
    %s22 = sphi 0, %s20
    %s23 = sphi 0, %s21
    %s35 = sphi 0, %s37
    %s38 = sphi 0, %s35
    %s39 = sphi 0, %s38
    %s55 = sphi 0, %s39
    %s61 = sphi 0, %s63
    %s64 = sphi 0, %s61
    %s65 = sphi 0, %s64
    %s81 = sphi 0, %s65
    %s87 = sphi 0, %s89
    %s90 = sphi 0, %s87
    %s91 = sphi 0, %s90
    %s107 = sphi 0, %s91
    %s115 = sphi 0, %s117
    %s118 = sphi 0, %s115
    %s119 = sphi 0, %s118
    %s135 = sphi 0, %s119
    %s143 = sphi 0, %s145
    %s146 = sphi 0, %s143
    %s147 = sphi 0, %s146
    %s163 = sphi 0, %s147
  $region4: #{scaled_dot_product_attention.1} parent=0 // loop_header_branch
    %14 = sbr.rel (%p12) target = $region8
  $region5: #{scaled_dot_product_attention.1} parent=0 // loop_body
    %s16 = ssub.s32 %s11, 1
    %s17 = ssub.s32 %s11, 2
    %s24 = sadd.s32 1, %s19
    %p25 = scmp.ge.s32.totalorder %s24, 1
    %s26 = scalar_select %p25, 0, %s24
    %s27 = sadd.s32 1, %s18
    %s28 = scalar_select %p25, %s27, %s18
    %p29 = scmp.ge.s32.totalorder %s28, 2
    %s30 = scalar_select %p29, 0, %s28
    %s31 = ssub.s32 %s18, %s30
    %s32 = ssub.s32 %s19, %s26
    %s33 = sor.u32 %s31, %s32
    %p34 = scmp.eq.s32.totalorder %s33, 0
    %s36 = sadd.s32 %s35, 1
    %s37 = scalar_select %p34, %s35, %s36
    %p40 = pneg %p34
    %p41 = scmp.eq.s32.totalorder %s11, 1
    %p42 = por %p40, %p41
    %p43 = scmp.ne.s32.totalorder %s35, %s38
    %p44 = scmp.eq.s32.totalorder %s11, 0
    %p45 = por %p43, %p44
    %p46 = scmp.ne.s32.totalorder %s35, %s38
    %p47 = scmp.eq.s32.totalorder %s16, 1
    %p48 = por %p46, %p47
    %p49 = scmp.ne.s32.totalorder %s38, %s39
    %p50 = scmp.eq.s32.totalorder %s16, 0
    %p51 = por %p49, %p50
    %p52 = scmp.ne.s32.totalorder %s38, %s39
    %p53 = scmp.eq.s32.totalorder %s17, 1
    %p54 = por %p52, %p53
    %p56 = scmp.ne.s32.totalorder %s39, %s55
    %p57 = scmp.eq.s32.totalorder %s17, 0
    %p58 = por %p56, %p57
    %s59 = ssub.s32 %s18, %s30
    %p60 = scmp.eq.s32.totalorder %s59, 0
    %s62 = sadd.s32 %s61, 1
    %s63 = scalar_select %p60, %s61, %s62
    %p66 = pneg %p60
    %p67 = scmp.eq.s32.totalorder %s11, 1
    %p68 = por %p66, %p67
    %p69 = scmp.ne.s32.totalorder %s61, %s64
    %p70 = scmp.eq.s32.totalorder %s11, 0
    %p71 = por %p69, %p70
    %p72 = scmp.ne.s32.totalorder %s61, %s64
    %p73 = scmp.eq.s32.totalorder %s16, 1
    %p74 = por %p72, %p73
    %p75 = scmp.ne.s32.totalorder %s64, %s65
    %p76 = scmp.eq.s32.totalorder %s16, 0
    %p77 = por %p75, %p76
    %p78 = scmp.ne.s32.totalorder %s64, %s65
    %p79 = scmp.eq.s32.totalorder %s17, 1
    %p80 = por %p78, %p79
    %p82 = scmp.ne.s32.totalorder %s65, %s81
    %p83 = scmp.eq.s32.totalorder %s17, 0
    %p84 = por %p82, %p83
    %s85 = ssub.s32 %s18, %s30
    %p86 = scmp.eq.s32.totalorder %s85, 0
    %s88 = sadd.s32 %s87, 1
    %s89 = scalar_select %p86, %s87, %s88
    %p92 = pneg %p86
    %p93 = scmp.eq.s32.totalorder %s11, 1
    %p94 = por %p92, %p93
    %p95 = scmp.ne.s32.totalorder %s87, %s90
    %p96 = scmp.eq.s32.totalorder %s11, 0
    %p97 = por %p95, %p96
    %p98 = scmp.ne.s32.totalorder %s87, %s90
    %p99 = scmp.eq.s32.totalorder %s16, 1
    %p100 = por %p98, %p99
    %p101 = scmp.ne.s32.totalorder %s90, %s91
    %p102 = scmp.eq.s32.totalorder %s16, 0
    %p103 = por %p101, %p102
    %p104 = scmp.ne.s32.totalorder %s90, %s91
    %p105 = scmp.eq.s32.totalorder %s17, 1
    %p106 = por %p104, %p105
    %p108 = scmp.ne.s32.totalorder %s91, %s107
    %p109 = scmp.eq.s32.totalorder %s17, 0
    %p110 = por %p108, %p109
    %s111 = ssub.s32 %s18, %s30
    %s112 = ssub.s32 %s19, %s26
    %s113 = sor.u32 %s111, %s112
    %p114 = scmp.eq.s32.totalorder %s113, 0
    %s116 = sadd.s32 %s115, 1
    %s117 = scalar_select %p114, %s115, %s116
    %p120 = pneg %p114
    %p121 = scmp.eq.s32.totalorder %s11, 1
    %p122 = por %p120, %p121
    %p123 = scmp.ne.s32.totalorder %s115, %s118
    %p124 = scmp.eq.s32.totalorder %s11, 0
    %p125 = por %p123, %p124
    %p126 = scmp.ne.s32.totalorder %s115, %s118
    %p127 = scmp.eq.s32.totalorder %s16, 1
    %p128 = por %p126, %p127
    %p129 = scmp.ne.s32.totalorder %s118, %s119
    %p130 = scmp.eq.s32.totalorder %s16, 0
    %p131 = por %p129, %p130
    %p132 = scmp.ne.s32.totalorder %s118, %s119
    %p133 = scmp.eq.s32.totalorder %s17, 1
    %p134 = por %p132, %p133
    %p136 = scmp.ne.s32.totalorder %s119, %s135
    %p137 = scmp.eq.s32.totalorder %s17, 0
    %p138 = por %p136, %p137
    %s139 = ssub.s32 %s18, %s30
    %s140 = ssub.s32 %s19, %s26
    %s141 = sor.u32 %s139, %s140
    %p142 = scmp.eq.s32.totalorder %s141, 0
    %s144 = sadd.s32 %s143, 1
    %s145 = scalar_select %p142, %s143, %s144
    %p148 = pneg %p142
    %p149 = scmp.eq.s32.totalorder %s11, 1
    %p150 = por %p148, %p149
    %p151 = scmp.ne.s32.totalorder %s143, %s146
    %p152 = scmp.eq.s32.totalorder %s11, 0
    %p153 = por %p151, %p152
    %p154 = scmp.ne.s32.totalorder %s143, %s146
    %p155 = scmp.eq.s32.totalorder %s16, 1
    %p156 = por %p154, %p155
    %p157 = scmp.ne.s32.totalorder %s146, %s147
    %p158 = scmp.eq.s32.totalorder %s16, 0
    %p159 = por %p157, %p158
    %p160 = scmp.ne.s32.totalorder %s146, %s147
    %p161 = scmp.eq.s32.totalorder %s17, 1
    %p162 = por %p160, %p161
    %p164 = scmp.ne.s32.totalorder %s147, %s163
    %p165 = scmp.eq.s32.totalorder %s17, 0
    %p166 = por %p164, %p165
    %p167 = scmp.le.s32.totalorder 1, %s11
    %p168 = scmp.lt.s32.totalorder %s11, 3
    %p169 = pnand %p167, %p168
    %p170 = pneg %p169
    // Predicated region
    $region9: #{scaled_dot_product_attention.1} parent=5 // pred_check
      _
    $region10: #{scaled_dot_product_attention.1} parent=5 // pred_check_branch
      %172 = sbr.rel (%p169) target = $region12
    $region11: #{scaled_dot_product_attention.1} parent=5 // pred_region
      %s173 = ssub.s32 %s11, 1
    $region12: #{scaled_dot_product_attention.1} parent=5 // pred_fallthru
      _
    %p174 = scmp.lt.s32.totalorder %s11, 2
    // Predicated region
    $region13: #{scaled_dot_product_attention.1} parent=5 // pred_check
      %p175 = pneg %p174
    $region14: #{scaled_dot_product_attention.1} parent=5 // pred_check_branch
      %177 = sbr.rel (%p175) target = $region16
    $region15: #{scaled_dot_product_attention.1} parent=5 // pred_region
      // Predicated region
      $region17: #{scaled_dot_product_attention.1} parent=15 // pred_check
        %p178 = pneg %p45
      $region18: #{scaled_dot_product_attention.1} parent=15 // pred_check_branch
        %180 = sbr.rel (%p178) target = $region20
      $region19: #{scaled_dot_product_attention.1} parent=15 // pred_region
        %p181 = scmp.lt.s32.totalorder %s18, 1
        %s182 = scalar_select %p181, %s18, 1
        %p183 = scmp.lt.s32.totalorder %s19, 0
        %s184 = scalar_select %p183, %s19, 0
        %s185 = sadd.s32 %s184, %s182
        %s186 = smul.addr %s185, 4
        %s187 = scalar_lea.vmem %s0, %s186
      $region20: #{scaled_dot_product_attention.1} parent=15 // pred_fallthru
        _
      // Predicated region
      $region21: #{scaled_dot_product_attention.1} parent=15 // pred_check
        %p188 = pneg %p71
      $region22: #{scaled_dot_product_attention.1} parent=15 // pred_check_branch
        %190 = sbr.rel (%p188) target = $region24
      $region23: #{scaled_dot_product_attention.1} parent=15 // pred_region
        %p191 = scmp.lt.s32.totalorder %s18, 1
        %s192 = scalar_select %p191, %s18, 1
        %s193 = smul.addr %s192, 4
        %s194 = scalar_lea.vmem %s1, %s193
      $region24: #{scaled_dot_product_attention.1} parent=15 // pred_fallthru
        _
      // Predicated region
      $region25: #{scaled_dot_product_attention.1} parent=15 // pred_check
        %p195 = pneg %p97
      $region26: #{scaled_dot_product_attention.1} parent=15 // pred_check_branch
        %197 = sbr.rel (%p195) target = $region28
      $region27: #{scaled_dot_product_attention.1} parent=15 // pred_region
        %p198 = scmp.lt.s32.totalorder %s18, 1
        %s199 = scalar_select %p198, %s18, 1
        %s200 = smul.addr %s199, 4
        %s201 = scalar_lea.vmem %s2, %s200
      $region28: #{scaled_dot_product_attention.1} parent=15 // pred_fallthru
        _
    $region16: #{scaled_dot_product_attention.1} parent=5 // pred_fallthru
      _
    %p202 = scmp.le.s32.totalorder 1, %s11
    %p203 = scmp.lt.s32.totalorder %s11, 3
    %p204 = pnand %p202, %p203
    %p205 = pneg %p204
    // Predicated region
    $region29: #{scaled_dot_product_attention.1} parent=5 // pred_check
      _
    $region30: #{scaled_dot_product_attention.1} parent=5 // pred_check_branch
      %207 = sbr.rel (%p204) target = $region32
    $region31: #{scaled_dot_product_attention.1} parent=5 // pred_region
      %s208 = ssub.s32 %s11, 1
      %p209 = scmp.lt.s32.totalorder %s20, 1
      %s210 = scalar_select %p209, %s20, 1
      %p211 = scmp.lt.s32.totalorder %s21, 0
      %s212 = scalar_select %p211, %s21, 0
      %s213 = sadd.s32 %s212, %s210
      %s214 = smul.addr %s213, 4
      %s215 = scalar_lea.vmem %s0, %s214
      %p216 = pneg %p51
      %p217 = pneg %p48
      %p218 = scmp.lt.s32.totalorder %s20, 1
      %s219 = scalar_select %p218, %s20, 1
      %s220 = smul.addr %s219, 4
      %s221 = scalar_lea.vmem %s1, %s220
      %p222 = pneg %p77
      %p223 = pneg %p74
      %p224 = scmp.lt.s32.totalorder %s20, 1
      %s225 = scalar_select %p224, %s20, 1
      %s226 = smul.addr %s225, 4
      %s227 = scalar_lea.vmem %s2, %s226
      %p228 = pneg %p103
      %p229 = pneg %p100
      %p230 = pneg %p131
      %p231 = pneg %p128
      %p232 = scmp.lt.s32.totalorder %s20, 1
      %s233 = scalar_select %p232, %s20, 1
      %p234 = scmp.lt.s32.totalorder %s21, 0
      %s235 = scalar_select %p234, %s21, 0
      %s236 = sadd.s32 %s235, %s233
      %s237 = smul.addr %s236, 8
      %s238 = scalar_lea.vmem %s3, %s237
      %p239 = pneg %p159
      %p240 = pneg %p156
      %p241 = scmp.lt.s32.totalorder %s20, 1
      %s242 = scalar_select %p241, %s20, 1
      %p243 = scmp.lt.s32.totalorder %s21, 0
      %s244 = scalar_select %p243, %s21, 0
      %s245 = sadd.s32 %s244, %s242
      %s246 = smul.addr %s245, 8
      %s247 = scalar_lea.vmem %s4, %s246
      %p248 = scmp.lt.s32.totalorder %s20, 1
      %s249 = scalar_select %p248, %s20, 1
      %p250 = scmp.lt.s32.totalorder %s21, 0
      %s251 = scalar_select %p250, %s21, 0
      %s252 = sadd.s32 %s251, %s249
      %s253 = smul.addr %s252, 4
      %s254 = scalar_lea.vmem %s0, %s253
      %p255 = scmp.lt.s32.totalorder %s20, 1
      %s256 = scalar_select %p255, %s20, 1
      %s257 = smul.addr %s256, 4
      %s258 = scalar_lea.vmem %s1, %s257
      %p259 = scmp.lt.s32.totalorder %s20, 1
      %s260 = scalar_select %p259, %s20, 1
      %s261 = smul.addr %s260, 4
      %s262 = scalar_lea.vmem %s2, %s261
      %p263 = scmp.lt.s32.totalorder %s20, 1
      %s264 = scalar_select %p263, %s20, 1
      %p265 = scmp.lt.s32.totalorder %s21, 0
      %s266 = scalar_select %p265, %s21, 0
      %s267 = sadd.s32 %s266, %s264
      %s268 = smul.addr %s267, 8
      %s269 = scalar_lea.vmem %s3, %s268
      %p270 = scmp.lt.s32.totalorder %s20, 1
      %s271 = scalar_select %p270, %s20, 1
      %p272 = scmp.lt.s32.totalorder %s21, 0
      %s273 = scalar_select %p272, %s21, 0
      %s274 = sadd.s32 %s273, %s271
      %s275 = smul.addr %s274, 8
      %s276 = scalar_lea.vmem %s4, %s275
      %v278 = vld [vmem:[%s254] sm:$0x7]
      %v279 = vld [vmem:[%s258] sm:$0x7]
      %v280 = vld [vmem:[%s262] sm:$0x7]
      %vm281 = vcmask 64512
      %v283 = vsel %vm281, %v278, 0
      %v286 = vsel %vm281, %v279, 0
      %288 = vmatprep.subr.bf16.mxu0 0
      %289 = vmatpush1.bf16.xpose.msra.mxu0 %v286
      %290 = vmatprep.subr.bf16.mxu0 0
      %291 = vmatpush1.bf16.xpose.msra.mxu0 0
      %292 = vmatprep.subr.bf16.mxu0 0
      %293 = vmatpush1.bf16.xpose.msra.mxu0 0
      %294 = vmatprep.subr.bf16.mxu0 0
      %295 = vmatpush1.bf16.xpose.msra.mxu0 0
      %296 = vmatprep.subr.bf16.mxu0 0
      %297 = vmatpush1.bf16.xpose.msra.mxu0 0
      %298 = vmatprep.subr.bf16.mxu0 0
      %299 = vmatpush1.bf16.xpose.msra.mxu0 0
      %300 = vmatprep.subr.bf16.mxu0 0
      %301 = vmatpush1.bf16.xpose.msra.mxu0 0
      %302 = vmatprep.subr.bf16.mxu0 0
      %303 = vmatpush1.bf16.xpose.msra.mxu0 0
      %304 = vmatprep.subr.bf16.mxu0 0
      %305 = vmatpush1.bf16.xpose.msra.mxu0 0
      %306 = vmatprep.subr.bf16.mxu0 0
      %307 = vmatpush1.bf16.xpose.msra.mxu0 0
      %308 = vmatprep.subr.bf16.mxu0 0
      %309 = vmatpush1.bf16.xpose.msra.mxu0 0
      %310 = vmatprep.subr.bf16.mxu0 0
      %311 = vmatpush1.bf16.xpose.msra.mxu0 0
      %312 = vmatprep.subr.bf16.mxu0 0
      %313 = vmatpush1.bf16.xpose.msra.mxu0 0
      %314 = vmatprep.subr.bf16.mxu0 0
      %315 = vmatpush1.bf16.xpose.msra.mxu0 0
      %316 = vmatprep.subr.bf16.mxu0 0
      %317 = vmatpush1.bf16.xpose.msra.mxu0 0
      %318 = vmatprep.subr.bf16.mxu0 0
      %319 = vmatpush1.bf16.xpose.msra.mxu0 0
      %320 = vmatprep.mubr.bf16.mxu0 0
      %321 = vmatmul.mubr.bf16.gmra.mrb[0].mxu0 %v283
      %v322 = vpop.f32.mrb[0].mxu0
      %v323 = vadd.f32 0.0, %v322
      %v324 = vpop.f32.mrb[0].mxu0
      %v325 = vpop.f32.mrb[0].mxu0
      %v326 = vpop.f32.mrb[0].mxu0
      %327 = vdwg.mxu0
      %vm328 = vcmask 36864
      %v329 = vsel %vm328, %v323, -inf
      %330 = vmax.xlane.f32.xlu0 %v329
      %v331 = vpop.xlane.xlu0 %330
      %v332 = vsub.f32 %v323, %v331
      %v333 = vmul.f32 %v332, 1.442695
      %v334 = vpow.pop %v333
      %v335 = vsel %vm328, %v334, 0.0
      %336 = vadd.xlane.f32.xlu0 %v335
      %v337 = vpop.xlane.xlu0 %336
      %v338 = vrcp.pop %v337
      %v339 = vmul.f32 %v334, %v338
      %v340 = vpack.c.bf16 %v339, %v339
      %vm341 = vcmask 39936
      %v343 = vsel %vm341, %v340, 0
      %vm345 = vcmask 1041408
      %vm346 = vcmask 1042432
      %v347 = vsel %vm345, 4294967295, 65535
      %v348 = vsel %vm346, %v347, 0
      %v350 = vand.u32 %v280, %v348
      %352 = vmatprep.subr.bf16.mxu0 0
      %353 = vmatpush1.bf16.msra.mxu0 %v350
      %354 = vmatprep.subr.bf16.mxu0 0
      %355 = vmatpush1.bf16.msra.mxu0 0
      %356 = vmatprep.subr.bf16.mxu0 0
      %357 = vmatpush1.bf16.msra.mxu0 0
      %358 = vmatprep.subr.bf16.mxu0 0
      %359 = vmatpush1.bf16.msra.mxu0 0
      %360 = vmatprep.subr.bf16.mxu0 0
      %361 = vmatpush1.bf16.msra.mxu0 0
      %362 = vmatprep.subr.bf16.mxu0 0
      %363 = vmatpush1.bf16.msra.mxu0 0
      %364 = vmatprep.subr.bf16.mxu0 0
      %365 = vmatpush1.bf16.msra.mxu0 0
      %366 = vmatprep.subr.bf16.mxu0 0
      %367 = vmatpush1.bf16.msra.mxu0 0
      %368 = vmatprep.subr.bf16.mxu0 0
      %369 = vmatpush1.bf16.msra.mxu0 0
      %370 = vmatprep.subr.bf16.mxu0 0
      %371 = vmatpush1.bf16.msra.mxu0 0
      %372 = vmatprep.subr.bf16.mxu0 0
      %373 = vmatpush1.bf16.msra.mxu0 0
      %374 = vmatprep.subr.bf16.mxu0 0
      %375 = vmatpush1.bf16.msra.mxu0 0
      %376 = vmatprep.subr.bf16.mxu0 0
      %377 = vmatpush1.bf16.msra.mxu0 0
      %378 = vmatprep.subr.bf16.mxu0 0
      %379 = vmatpush1.bf16.msra.mxu0 0
      %380 = vmatprep.subr.bf16.mxu0 0
      %381 = vmatpush1.bf16.msra.mxu0 0
      %382 = vmatprep.subr.bf16.mxu0 0
      %383 = vmatpush1.bf16.msra.mxu0 0
      %384 = vmatprep.mubr.bf16.mxu0 0
      %385 = vmatmul.mubr.bf16.gmra.mrb[0].mxu0 %v343
      %v386 = vpop.f32.mrb[0].mxu0
      %v387 = vadd.f32 0.0, %v386
      %v388 = vpop.f32.mrb[0].mxu0
      %v389 = vpop.f32.mrb[0].mxu0
      %v390 = vpop.f32.mrb[0].mxu0
      %391 = vdwg.mxu0
      %vm392 = vcmask 61440
      %393 = vst.msk [vmem:[%s269] sm:$0x1f] %vm392, %v387
      %394 = vst.msk [vmem:[%s276] sm:$0x1f] %vm328, %v339
      %p395 = scmp.lt.s32.totalorder %s20, 1
      %s396 = scalar_select %p395, %s20, 1
      %p397 = scmp.lt.s32.totalorder %s21, 0
      %s398 = scalar_select %p397, %s21, 0
      %s399 = sadd.s32 %s398, %s396
      %s400 = smul.addr %s399, 8
      %s401 = scalar_lea.vmem %s3, %s400
      %p402 = scmp.lt.s32.totalorder %s20, 1
      %s403 = scalar_select %p402, %s20, 1
      %p404 = scmp.lt.s32.totalorder %s21, 0
      %s405 = scalar_select %p404, %s21, 0
      %s406 = sadd.s32 %s405, %s403
      %s407 = smul.addr %s406, 8
      %s408 = scalar_lea.vmem %s4, %s407
      // Predicated region
      $region33: #{scaled_dot_product_attention.1} parent=31 // pred_check
        %p409 = pneg %p128
      $region34: #{scaled_dot_product_attention.1} parent=31 // pred_check_branch
        %411 = sbr.rel (%p409) target = $region36
      $region35: #{scaled_dot_product_attention.1} parent=31 // pred_region
        _
      $region36: #{scaled_dot_product_attention.1} parent=31 // pred_fallthru
        _
      // Predicated region
      $region37: #{scaled_dot_product_attention.1} parent=31 // pred_check
        %p412 = pneg %p156
      $region38: #{scaled_dot_product_attention.1} parent=31 // pred_check_branch
        %414 = sbr.rel (%p412) target = $region40
      $region39: #{scaled_dot_product_attention.1} parent=31 // pred_region
        _
      $region40: #{scaled_dot_product_attention.1} parent=31 // pred_fallthru
        _
    $region32: #{scaled_dot_product_attention.1} parent=5 // pred_fallthru
      _
    %p415 = scmp.le.s32.totalorder 2, %s11
    // Predicated region
    $region41: #{scaled_dot_product_attention.1} parent=5 // pred_check
      %p416 = pneg %p415
    $region42: #{scaled_dot_product_attention.1} parent=5 // pred_check_branch
      %418 = sbr.rel (%p416) target = $region44
    $region43: #{scaled_dot_product_attention.1} parent=5 // pred_region
      %s419 = ssub.s32 %s11, 2
      // Predicated region
      $region45: #{scaled_dot_product_attention.1} parent=43 // pred_check
        %p420 = pneg %p134
      $region46: #{scaled_dot_product_attention.1} parent=43 // pred_check_branch
        %422 = sbr.rel (%p420) target = $region48
      $region47: #{scaled_dot_product_attention.1} parent=43 // pred_region
        %p423 = scmp.lt.s32.totalorder %s22, 1
        %s424 = scalar_select %p423, %s22, 1
        %p425 = scmp.lt.s32.totalorder %s23, 0
        %s426 = scalar_select %p425, %s23, 0
        %s427 = sadd.s32 %s426, %s424
        %s428 = smul.addr %s427, 8
        %s429 = scalar_lea.vmem %s3, %s428
      $region48: #{scaled_dot_product_attention.1} parent=43 // pred_fallthru
        _
      // Predicated region
      $region49: #{scaled_dot_product_attention.1} parent=43 // pred_check
        %p430 = pneg %p162
      $region50: #{scaled_dot_product_attention.1} parent=43 // pred_check_branch
        %432 = sbr.rel (%p430) target = $region52
      $region51: #{scaled_dot_product_attention.1} parent=43 // pred_region
        %p433 = scmp.lt.s32.totalorder %s22, 1
        %s434 = scalar_select %p433, %s22, 1
        %p435 = scmp.lt.s32.totalorder %s23, 0
        %s436 = scalar_select %p435, %s23, 0
        %s437 = sadd.s32 %s436, %s434
        %s438 = smul.addr %s437, 8
        %s439 = scalar_lea.vmem %s4, %s438
      $region52: #{scaled_dot_product_attention.1} parent=43 // pred_fallthru
        _
    $region44: #{scaled_dot_product_attention.1} parent=5 // pred_fallthru
      _
  $region6: #{scaled_dot_product_attention.1} parent=0 // loop_footer
    %s15 = sadd.s32 1, %s11
  $region7: #{scaled_dot_product_attention.1} parent=0 // loop_footer_branch
    %10 = sbr.rel target = $region3
  $region8: #{scaled_dot_product_attention.1} parent=0 // loop_exit
    _

</llo_original>
